<compile_context>
chip_gen: v7x
topology: tpu7x:2x2x1
jax: 0.10.0
libtpu: 0.0.40
codegen_flags: <defaults>
</compile_context>

<pallas_src>
import functools

import jax
import jax.numpy as jnp
from jax.experimental import pallas as pl
from jax.experimental.pallas import tpu as pltpu

BN_EPS = 1e-5
LANE = 128
SUBLANE = 8

# On v6e/v7x the MXU is bf16-native: flipping this to jnp.bfloat16 (f32
# accumulation is kept via preferred_element_type) ~2x-es matmul throughput and
# halves the patches HBM stream, but would exceed the 1e-4 check against the
# f32 reference, so it stays f32 here.
MATMUL_DTYPE = jnp.float32


def _round_up(x, m):
    return (x + m - 1) // m * m


# ---------------------------------------------------------------------------
# Fused kernel: conv-as-matmul + batch-stat accumulation + BN + ReLU.
#   p_ref:   (TR, KD_pad)      im2col patch tile for this grid step
#   w_ref:   (KD_pad, C_pad)   folded conv weights (grid-invariant)
#   g_ref:   (1, C_pad)        BN gamma (zero-padded past Cout)
#   b_ref:   (1, C_pad)        BN beta  (zero-padded past Cout)
#   out_ref: (R_pad, C_pad)    full activation slab, resident in VMEM across
#                              all grid steps (constant output block index)
#   sum_sc / sumsq_sc: (1, C_pad) per-channel accumulators across grid steps
# ---------------------------------------------------------------------------
def _conv_bn_relu_kernel(p_ref, w_ref, g_ref, b_ref, out_ref,
                         sum_sc, sumsq_sc, *, count, rows_per_tile):
    i = pl.program_id(0)

    @pl.when(i == 0)
    def _():
        sum_sc[...] = jnp.zeros_like(sum_sc)
        sumsq_sc[...] = jnp.zeros_like(sumsq_sc)

    acc = jnp.dot(p_ref[...], w_ref[...], preferred_element_type=jnp.float32)

    row0 = pl.multiple_of(i * rows_per_tile, rows_per_tile)
    out_ref[pl.ds(row0, rows_per_tile), :] = acc

    # Padded (all-zero) patch rows produce exactly-zero acc rows, so dividing
    # by the real element count below still gives exact batch statistics.
    sum_sc[...] += jnp.sum(acc, axis=0, keepdims=True)
    sumsq_sc[...] += jnp.sum(acc * acc, axis=0, keepdims=True)

    @pl.when(i == pl.num_programs(0) - 1)
    def _():
        inv_n = 1.0 / count
        mean = sum_sc[...] * inv_n
        var = jnp.maximum(sumsq_sc[...] * inv_n - mean * mean, 0.0)
        inv_std = jax.lax.rsqrt(var + BN_EPS)
        scale = g_ref[...] * inv_std          # zero-padded channels -> scale 0
        shift = b_ref[...] - mean * scale     #                      -> shift 0
        # Normalize the whole resident slab in place; it is written back to
        # HBM exactly once, after this (final) grid step.
        out_ref[...] = jnp.maximum(out_ref[...] * scale + shift, 0.0)


def basic2d_block(x_nchw, w_oihw, bias, gamma, beta, *, kernel_size=3):
    """x_nchw: (N, Cin, H, W) float32. Returns (N, Cout, H, W) float32."""
    del bias  # Conv bias is algebraically cancelled by BN mean subtraction.

    N, Cin, H, W = x_nchw.shape
    Cout = w_oihw.shape[0]
    K = kernel_size
    pad = (K - 1) // 2

    R = N * H * W
    TR = min(1024, _round_up(R, SUBLANE))          # rows per grid step
    R_pad = _round_up(R, TR)
    n_tiles = R_pad // TR
    KD = K * K * Cin
    KD_pad = _round_up(KD, SUBLANE)                # 36 -> 40, NOT 128
    C_pad = _round_up(Cout, LANE)                  # lane-dense output

    # --- host-side glue (layout + im2col + padding), all plain XLA ---
    x_nhwc = jnp.transpose(x_nchw, (0, 2, 3, 1))
    xp = jnp.pad(x_nhwc, ((0, 0), (pad, pad), (pad, pad), (0, 0)))
    cols = [xp[:, kh:kh + H, kw:kw + W, :] for kh in range(K) for kw in range(K)]
    patches = jnp.concatenate(cols, axis=-1).reshape(R, KD)
    patches = jnp.pad(patches, ((0, R_pad - R), (0, KD_pad - KD)))
    patches = patches.astype(MATMUL_DTYPE)

    w_mat = jnp.transpose(w_oihw, (2, 3, 1, 0)).reshape(KD, Cout)  # [kh,kw,ci] x co
    w_mat = jnp.pad(w_mat, ((0, KD_pad - KD), (0, C_pad - Cout))).astype(MATMUL_DTYPE)
    g2 = jnp.pad(gamma.reshape(1, Cout), ((0, 0), (0, C_pad - Cout)))
    b2 = jnp.pad(beta.reshape(1, Cout), ((0, 0), (0, C_pad - Cout)))

    # --- VMEM budget (fused path keeps the full activation slab resident) ---
    itemsize = jnp.dtype(MATMUL_DTYPE).itemsize
    slab_bytes = R_pad * C_pad * 4
    step_bytes = 2 * TR * KD_pad * itemsize          # double-buffered patches
    const_bytes = 2 * (KD_pad * C_pad * itemsize + 2 * C_pad * 4)
    vmem_bytes = 2 * slab_bytes + step_bytes + const_bytes + (1 << 20)
    assert slab_bytes <= 24 * 1024 * 1024, (
        "fused path requires the activation slab to stay resident in VMEM; "
        "see TODO(synk) for the 2-sweep fallback")
    vmem_limit = min(max(vmem_bytes, 16 << 20), 48 << 20)

    cost = pl.CostEstimate(
        flops=2 * R_pad * KD_pad * C_pad + 4 * R_pad * C_pad,
        transcendentals=C_pad,
        bytes_accessed=(itemsize * (R_pad * KD_pad + KD_pad * C_pad)
                        + 4 * (R_pad * C_pad + 4 * C_pad)))

    kernel = functools.partial(_conv_bn_relu_kernel,
                               count=float(R), rows_per_tile=TR)

    out_slab = pl.pallas_call(
        kernel,
        out_shape=jax.ShapeDtypeStruct((R_pad, C_pad), jnp.float32),
        grid_spec=pltpu.PrefetchScalarGridSpec(
            num_scalar_prefetch=0,
            grid=(n_tiles,),
            in_specs=[
                # (TR, KD_pad): last dim equals the full array dim, so the
                # (8,128) divisibility rule is satisfied without 128-padding.
                pl.BlockSpec((TR, KD_pad), lambda i: (i, 0)),
                pl.BlockSpec((KD_pad, C_pad), lambda i: (0, 0)),
                pl.BlockSpec((1, C_pad), lambda i: (0, 0)),
                pl.BlockSpec((1, C_pad), lambda i: (0, 0)),
            ],
            # Constant block index -> output slab resident in VMEM across the
            # whole grid; written back to HBM once, after the last step.
            out_specs=pl.BlockSpec((R_pad, C_pad), lambda i: (0, 0)),
            scratch_shapes=[pltpu.VMEM((1, C_pad), jnp.float32),
                            pltpu.VMEM((1, C_pad), jnp.float32)]),
        compiler_params=pltpu.CompilerParams(
            dimension_semantics=("arbitrary",),
            vmem_limit_bytes=vmem_limit),
        cost_estimate=cost,
    )(patches, w_mat, g2, b2)

    out = out_slab[:R, :Cout].reshape(N, H, W, Cout)
    return jnp.transpose(out, (0, 3, 1, 2))


def _reference(x_nchw, w_oihw, bias, gamma, beta):
    """Pure-JAX reference matching PyTorch Basic2DBlock.forward (train-mode BN)."""
    y = jax.lax.conv_general_dilated(
        x_nchw, w_oihw, window_strides=(1, 1), padding="SAME",
        dimension_numbers=("NCHW", "OIHW", "NCHW"))
    y = y + bias.reshape(1, -1, 1, 1)
    mean = jnp.mean(y, axis=(0, 2, 3), keepdims=True)
    var = jnp.mean((y - mean) ** 2, axis=(0, 2, 3), keepdims=True)
    y = (y - mean) * jax.lax.rsqrt(var + BN_EPS)
    y = y * gamma.reshape(1, -1, 1, 1) + beta.reshape(1, -1, 1, 1)
    return jnp.maximum(y, 0.0)


if __name__ == "__main__":
    # Small shapes consistent with the module: in_planes=4, out_planes=8, 16x16.
    N, Cin, Cout, H, W, K = 2, 4, 8, 16, 16, 3

    key = jax.random.PRNGKey(0)
    kx, kw, kb, kg, kbe = jax.random.split(key, 5)

    x = jax.random.normal(kx, (N, Cin, H, W), dtype=jnp.float32)
    # Deterministic synthetic parameters (not a checkpoint load).
    w = jax.random.normal(kw, (Cout, Cin, K, K), dtype=jnp.float32) * 0.1
    b = jax.random.normal(kb, (Cout,), dtype=jnp.float32) * 0.1
    gamma = 1.0 + 0.1 * jax.random.normal(kg, (Cout,), dtype=jnp.float32)
    beta = 0.1 * jax.random.normal(kbe, (Cout,), dtype=jnp.float32)

    out = basic2d_block(x, w, b, gamma, beta, kernel_size=K)
    out = jax.block_until_ready(out)

    ref = jax.block_until_ready(_reference(x, w, b, gamma, beta))
    assert out.shape == (N, Cout, H, W)
    assert jnp.allclose(out, ref, rtol=1e-4, atol=1e-4), "mismatch vs reference"

    print("KERNEL_OK")
</pallas_src>

<mosaic_0001>
module attributes {stable_mosaic.version = 11 : i64} {
  func.func @_conv_bn_relu_kernel(%arg0: i32, %arg1: memref<512x40xf32, #tpu.memory_space<vmem>>, %arg2: memref<40x128xf32, #tpu.memory_space<vmem>>, %arg3: memref<1x128xf32, #tpu.memory_space<vmem>>, %arg4: memref<1x128xf32, #tpu.memory_space<vmem>>, %arg5: memref<512x128xf32, #tpu.memory_space<vmem>>, %arg6: memref<1x128xf32, #tpu.memory_space<vmem>>, %arg7: memref<1x128xf32, #tpu.memory_space<vmem>>) attributes {dimension_semantics = [#tpu.dimension_semantics<arbitrary>], iteration_bounds = array<i64: 1>, scalar_prefetch = 0 : i64, scratch_operands = 2 : i64, tpu.core_type = #tpu.core_type<tc>, window_params = [{transform_indices = @transform_0, window_bounds = array<i64: 512, 40>}, {pipeline_mode = #tpu.pipeline_mode<synchronous>, transform_indices = @transform_1, window_bounds = array<i64: 40, 128>}, {pipeline_mode = #tpu.pipeline_mode<synchronous>, transform_indices = @transform_2, window_bounds = array<i64: 1, 128>}, {pipeline_mode = #tpu.pipeline_mode<synchronous>, transform_indices = @transform_3, window_bounds = array<i64: 1, 128>}, {pipeline_mode = #tpu.pipeline_mode<synchronous>, transform_indices = @transform_4, window_bounds = array<i64: 512, 128>}]} {
    %c0_i32 = arith.constant 0 : i32
    %0 = arith.cmpi eq, %arg0, %c0_i32 : i32
    %1 = arith.extui %0 : i1 to i32
    %c0_i32_0 = arith.constant 0 : i32
    %2 = arith.cmpi ne, %1, %c0_i32_0 : i32
    scf.if %2 {
      %cst_17 = arith.constant 0.000000e+00 : f32
      %24 = vector.broadcast %cst_17 : f32 to vector<1x128xf32>
      %c0_18 = arith.constant 0 : index
      %c0_19 = arith.constant 0 : index
      %25 = vector.load %arg6[%c0_18, %c0_19] : memref<1x128xf32, #tpu.memory_space<vmem>>, vector<1x128xf32>
      tpu.vector_store %arg6[%c0_18, %c0_19], %24 {strides = array<i32>} : memref<1x128xf32, #tpu.memory_space<vmem>>, vector<1x128xf32>,
      %cst_20 = arith.constant 0.000000e+00 : f32
      %26 = vector.broadcast %cst_20 : f32 to vector<1x128xf32>
      %c0_21 = arith.constant 0 : index
      %c0_22 = arith.constant 0 : index
      %27 = vector.load %arg7[%c0_21, %c0_22] : memref<1x128xf32, #tpu.memory_space<vmem>>, vector<1x128xf32>
      tpu.vector_store %arg7[%c0_21, %c0_22], %26 {strides = array<i32>} : memref<1x128xf32, #tpu.memory_space<vmem>>, vector<1x128xf32>,
    } else {
    }
    %c0 = arith.constant 0 : index
    %c0_1 = arith.constant 0 : index
    %3 = vector.load %arg1[%c0, %c0_1] : memref<512x40xf32, #tpu.memory_space<vmem>>, vector<512x40xf32>
    %c0_2 = arith.constant 0 : index
    %c0_3 = arith.constant 0 : index
    %4 = vector.load %arg2[%c0_2, %c0_3] : memref<40x128xf32, #tpu.memory_space<vmem>>, vector<40x128xf32>
    %cst = arith.constant dense<0.000000e+00> : vector<512x128xf32>
    %5 = tpu.matmul %3, %4, %cst {dimension_numbers = #tpu.dot_dimension_numbers<[1], [0], [0], [1], [0, 0, 1, 1], [], []>} : vector<512x40xf32>, vector<40x128xf32>, vector<512x128xf32> -> vector<512x128xf32>
    %c512_i32 = arith.constant 512 : i32
    %6 = arith.muli %arg0, %c512_i32 : i32
    %7 = tpu.assume_multiple %6, 512 : i32
    %8 = arith.index_cast %7 : i32 to index
    %c0_4 = arith.constant 0 : index
    %9 = vector.load %arg5[%8, %c0_4] : memref<512x128xf32, #tpu.memory_space<vmem>>, vector<512x128xf32>
    tpu.vector_store %arg5[%8, %c0_4], %5 {strides = array<i32>} : memref<512x128xf32, #tpu.memory_space<vmem>>, vector<512x128xf32>,
    %c0_5 = arith.constant 0 : index
    %c0_6 = arith.constant 0 : index
    %10 = vector.load %arg6[%c0_5, %c0_6] : memref<1x128xf32, #tpu.memory_space<vmem>>, vector<1x128xf32>
    %cst_7 = arith.constant dense<0.000000e+00> : vector<128xf32>
    %11 = vector.multi_reduction <add>, %5, %cst_7 [0] : vector<512x128xf32> to vector<128xf32>
    %12 = vector.shape_cast %11 : vector<128xf32> to vector<1x128xf32>
    %13 = arith.addf %10, %12 : vector<1x128xf32>
    %c0_8 = arith.constant 0 : index
    %c0_9 = arith.constant 0 : index
    %14 = vector.load %arg6[%c0_8, %c0_9] : memref<1x128xf32, #tpu.memory_space<vmem>>, vector<1x128xf32>
    tpu.vector_store %arg6[%c0_8, %c0_9], %13 {strides = array<i32>} : memref<1x128xf32, #tpu.memory_space<vmem>>, vector<1x128xf32>,
    %c0_10 = arith.constant 0 : index
    %c0_11 = arith.constant 0 : index
    %15 = vector.load %arg7[%c0_10, %c0_11] : memref<1x128xf32, #tpu.memory_space<vmem>>, vector<1x128xf32>
    %16 = arith.mulf %5, %5 : vector<512x128xf32>
    %cst_12 = arith.constant dense<0.000000e+00> : vector<128xf32>
    %17 = vector.multi_reduction <add>, %16, %cst_12 [0] : vector<512x128xf32> to vector<128xf32>
    %18 = vector.shape_cast %17 : vector<128xf32> to vector<1x128xf32>
    %19 = arith.addf %15, %18 : vector<1x128xf32>
    %c0_13 = arith.constant 0 : index
    %c0_14 = arith.constant 0 : index
    %20 = vector.load %arg7[%c0_13, %c0_14] : memref<1x128xf32, #tpu.memory_space<vmem>>, vector<1x128xf32>
    tpu.vector_store %arg7[%c0_13, %c0_14], %19 {strides = array<i32>} : memref<1x128xf32, #tpu.memory_space<vmem>>, vector<1x128xf32>,
    %c0_i32_15 = arith.constant 0 : i32
    %21 = arith.cmpi eq, %arg0, %c0_i32_15 : i32
    %22 = arith.extui %21 : i1 to i32
    %c0_i32_16 = arith.constant 0 : i32
    %23 = arith.cmpi ne, %22, %c0_i32_16 : i32
    scf.if %23 {
      %c0_17 = arith.constant 0 : index
      %c0_18 = arith.constant 0 : index
      %24 = vector.load %arg6[%c0_17, %c0_18] : memref<1x128xf32, #tpu.memory_space<vmem>>, vector<1x128xf32>
      %cst_19 = arith.constant 0.001953125 : f32
      %25 = vector.broadcast %cst_19 : f32 to vector<1x128xf32>
      %26 = arith.mulf %24, %25 : vector<1x128xf32>
      %c0_20 = arith.constant 0 : index
      %c0_21 = arith.constant 0 : index
      %27 = vector.load %arg7[%c0_20, %c0_21] : memref<1x128xf32, #tpu.memory_space<vmem>>, vector<1x128xf32>
      %cst_22 = arith.constant 0.001953125 : f32
      %28 = vector.broadcast %cst_22 : f32 to vector<1x128xf32>
      %29 = arith.mulf %27, %28 : vector<1x128xf32>
      %30 = arith.mulf %26, %26 : vector<1x128xf32>
      %31 = arith.subf %29, %30 : vector<1x128xf32>
      %cst_23 = arith.constant 0.000000e+00 : f32
      %32 = vector.broadcast %cst_23 : f32 to vector<1x128xf32>
      %33 = arith.maximumf %31, %32 : vector<1x128xf32>
      %cst_24 = arith.constant 9.99999974E-6 : f32
      %34 = vector.broadcast %cst_24 : f32 to vector<1x128xf32>
      %35 = arith.addf %33, %34 : vector<1x128xf32>
      %36 = math.rsqrt %35 : vector<1x128xf32>
      %c0_25 = arith.constant 0 : index
      %c0_26 = arith.constant 0 : index
      %37 = vector.load %arg3[%c0_25, %c0_26] : memref<1x128xf32, #tpu.memory_space<vmem>>, vector<1x128xf32>
      %38 = arith.mulf %37, %36 : vector<1x128xf32>
      %c0_27 = arith.constant 0 : index
      %c0_28 = arith.constant 0 : index
      %39 = vector.load %arg4[%c0_27, %c0_28] : memref<1x128xf32, #tpu.memory_space<vmem>>, vector<1x128xf32>
      %40 = arith.mulf %26, %38 : vector<1x128xf32>
      %41 = arith.subf %39, %40 : vector<1x128xf32>
      %c0_29 = arith.constant 0 : index
      %c0_30 = arith.constant 0 : index
      %42 = vector.load %arg5[%c0_29, %c0_30] : memref<512x128xf32, #tpu.memory_space<vmem>>, vector<512x128xf32>
      %43 = vector.broadcast %38 : vector<1x128xf32> to vector<512x128xf32>
      %44 = arith.mulf %42, %43 : vector<512x128xf32>
      %45 = vector.broadcast %41 : vector<1x128xf32> to vector<512x128xf32>
      %46 = arith.addf %44, %45 : vector<512x128xf32>
      %cst_31 = arith.constant 0.000000e+00 : f32
      %47 = vector.broadcast %cst_31 : f32 to vector<512x128xf32>
      %48 = arith.maximumf %46, %47 : vector<512x128xf32>
      %c0_32 = arith.constant 0 : index
      %c0_33 = arith.constant 0 : index
      %49 = vector.load %arg5[%c0_32, %c0_33] : memref<512x128xf32, #tpu.memory_space<vmem>>, vector<512x128xf32>
      tpu.vector_store %arg5[%c0_32, %c0_33], %48 {strides = array<i32>} : memref<512x128xf32, #tpu.memory_space<vmem>>, vector<512x128xf32>,
    } else {
    }
    return
  }
  func.func @transform_0(%arg0: i32) -> (i32, i32) {
    %c0_i32 = arith.constant 0 : i32
    %c0_i32_0 = arith.constant 0 : i32
    return %arg0, %c0_i32 : i32, i32
  }
  func.func @transform_1(%arg0: i32) -> (i32, i32) {
    %c0_i32 = arith.constant 0 : i32
    %c0_i32_0 = arith.constant 0 : i32
    %c0_i32_1 = arith.constant 0 : i32
    return %c0_i32, %c0_i32_0 : i32, i32
  }
  func.func @transform_2(%arg0: i32) -> (i32, i32) {
    %c0_i32 = arith.constant 0 : i32
    %c0_i32_0 = arith.constant 0 : i32
    %c0_i32_1 = arith.constant 0 : i32
    return %c0_i32, %c0_i32_0 : i32, i32
  }
  func.func @transform_3(%arg0: i32) -> (i32, i32) {
    %c0_i32 = arith.constant 0 : i32
    %c0_i32_0 = arith.constant 0 : i32
    %c0_i32_1 = arith.constant 0 : i32
    return %c0_i32, %c0_i32_0 : i32, i32
  }
  func.func @transform_4(%arg0: i32) -> (i32, i32) {
    %c0_i32 = arith.constant 0 : i32
    %c0_i32_0 = arith.constant 0 : i32
    %c0_i32_1 = arith.constant 0 : i32
    return %c0_i32, %c0_i32_0 : i32, i32
  }
}

</mosaic_0001>

<llo_original>
// kernel: tpu_custom_call.1
$region0: #{tpu_custom_call.1}
  #allocation0 [shape = 'u32[]', space=smem, size = 0x4, offset = 0x4, fixed_abs, tag = 'smem constant byte address 0x4 - core index']
  #allocation1 [shape = 'u32[144,128]{1,0:T(1,128)}', space=vmem, size = 0x12000, scoped, tag = 'internal scratch']
  #allocation2 [shape = 'f32[1,128]{1,0:T(1,128)}', space=vmem, size = 0x200, scoped, tag = 'scratch operand']
  #allocation3 [shape = 'f32[1,128]{1,0:T(1,128)}', space=vmem, size = 0x200, scoped, tag = 'scratch operand']
  %s0 = inlined_call_operand.vmem [shape: f32[512,40], index: 0, kind: input, shape index: {}]
  %s1 = inlined_call_operand.vmem [shape: f32[40,128], index: 1, kind: input, shape index: {}]
  %s2 = inlined_call_operand.vmem [shape: f32[1,128], index: 2, kind: input, shape index: {}]
  %s3 = inlined_call_operand.vmem [shape: f32[1,128], index: 3, kind: input, shape index: {}]
  %s4 = inlined_call_operand.hbm [shape: f32[512,128], index: 4, kind: output, shape index: {}]
  %s5 = sld [smem:[#allocation0]]
  $region34: #{tpu_custom_call.1} parent=0
    _
  %s7 = ssub.s32 1, %s5
  %s8 = scalar_select 0, %s7, %s5
  $region1: #{tpu_custom_call.1} parent=0
    #allocation4 [shape = 'u8[262144]{0}', space=vmem, size = 0x40000, scoped, tag = 'output window, operand 0, single buffered']
    #allocation5 [shape = 's32[1]{0}', space=sflag, size = 0x4, scoped, tag = 'scoped memory for tpu_custom_call.1']
    %9 = vsyncpa [#allocation5], 0
    // Predicated region
    $region2: #{tpu_custom_call.1} parent=1 // pred_check
      _
    $region3: #{tpu_custom_call.1} parent=1 // pred_check_branch
      %11 = sbr.rel (0) target = $region5
    $region4: #{tpu_custom_call.1} parent=1 // pred_region
      _
    $region5: #{tpu_custom_call.1} parent=1 // pred_fallthru
      _
    // Predicated region
    $region6: #{tpu_custom_call.1} parent=1 // pred_check
      _
    $region7: #{tpu_custom_call.1} parent=1 // pred_check_branch
      %13 = sbr.rel (0) target = $region9
    $region8: #{tpu_custom_call.1} parent=1 // pred_region
      _
    $region9: #{tpu_custom_call.1} parent=1 // pred_fallthru
      _
    // Predicated region
    $region10: #{tpu_custom_call.1} parent=1 // pred_check
      _
    $region11: #{tpu_custom_call.1} parent=1 // pred_check_branch
      %15 = sbr.rel (0) target = $region13
    $region12: #{tpu_custom_call.1} parent=1 // pred_region
      _
    $region13: #{tpu_custom_call.1} parent=1 // pred_fallthru
      _
    // Predicated region
    $region14: #{tpu_custom_call.1} parent=1 // pred_check
      _
    $region15: #{tpu_custom_call.1} parent=1 // pred_check_branch
      %17 = sbr.rel (0) target = $region17
    $region16: #{tpu_custom_call.1} parent=1 // pred_region
      _
    $region17: #{tpu_custom_call.1} parent=1 // pred_fallthru
      _
    %p18 = scmp.eq.s32.totalorder 0, 0
    // Predicated region
    $region18: #{tpu_custom_call.1} parent=1 // pred_check
      %p19 = pneg %p18
    $region19: #{tpu_custom_call.1} parent=1 // pred_check_branch
      %21 = sbr.rel (%p19) target = $region21
    $region20: #{tpu_custom_call.1} parent=1 // pred_region
      %22 = vst [vmem:[#allocation2] sm:$0x1] 0.0
      %23 = vst [vmem:[#allocation3] sm:$0x1] 0.0
    $region21: #{tpu_custom_call.1} parent=1 // pred_fallthru
      _
    %v24 = vld [vmem:[%s0] sm:$0xff]
    %v25 = vld [vmem:[%s0 + $0x8] sm:$0xff]
    %v26 = vld [vmem:[%s0 + $0x10] sm:$0xff]
    %v27 = vld [vmem:[%s0 + $0x18] sm:$0xff]
    %v28 = vld [vmem:[%s0 + $0x20] sm:$0xff]
    %v29 = vld [vmem:[%s0 + $0x28] sm:$0xff]
    %v30 = vld [vmem:[%s0 + $0x30] sm:$0xff]
    %v31 = vld [vmem:[%s0 + $0x38] sm:$0xff]
    %v32 = vld [vmem:[%s0 + $0x40] sm:$0xff]
    %v33 = vld [vmem:[%s0 + $0x48] sm:$0xff]
    %v34 = vld [vmem:[%s0 + $0x50] sm:$0xff]
    %v35 = vld [vmem:[%s0 + $0x58] sm:$0xff]
    %v36 = vld [vmem:[%s0 + $0x60] sm:$0xff]
    %v37 = vld [vmem:[%s0 + $0x68] sm:$0xff]
    %v38 = vld [vmem:[%s0 + $0x70] sm:$0xff]
    %v39 = vld [vmem:[%s0 + $0x78] sm:$0xff]
    %v40 = vld [vmem:[%s0 + $0x80] sm:$0xff]
    %v41 = vld [vmem:[%s0 + $0x88] sm:$0xff]
    %v42 = vld [vmem:[%s0 + $0x90] sm:$0xff]
    %v43 = vld [vmem:[%s0 + $0x98] sm:$0xff]
    %v44 = vld [vmem:[%s0 + $0xa0] sm:$0xff]
    %v45 = vld [vmem:[%s0 + $0xa8] sm:$0xff]
    %v46 = vld [vmem:[%s0 + $0xb0] sm:$0xff]
    %v47 = vld [vmem:[%s0 + $0xb8] sm:$0xff]
    %v48 = vld [vmem:[%s0 + $0xc0] sm:$0xff]
    %v49 = vld [vmem:[%s0 + $0xc8] sm:$0xff]
    %v50 = vld [vmem:[%s0 + $0xd0] sm:$0xff]
    %v51 = vld [vmem:[%s0 + $0xd8] sm:$0xff]
    %v52 = vld [vmem:[%s0 + $0xe0] sm:$0xff]
    %v53 = vld [vmem:[%s0 + $0xe8] sm:$0xff]
    %v54 = vld [vmem:[%s0 + $0xf0] sm:$0xff]
    %v55 = vld [vmem:[%s0 + $0xf8] sm:$0xff]
    %v56 = vld [vmem:[%s0 + $0x100] sm:$0xff]
    %v57 = vld [vmem:[%s0 + $0x108] sm:$0xff]
    %v58 = vld [vmem:[%s0 + $0x110] sm:$0xff]
    %v59 = vld [vmem:[%s0 + $0x118] sm:$0xff]
    %v60 = vld [vmem:[%s0 + $0x120] sm:$0xff]
    %v61 = vld [vmem:[%s0 + $0x128] sm:$0xff]
    %v62 = vld [vmem:[%s0 + $0x130] sm:$0xff]
    %v63 = vld [vmem:[%s0 + $0x138] sm:$0xff]
    %v64 = vld [vmem:[%s0 + $0x140] sm:$0xff]
    %v65 = vld [vmem:[%s0 + $0x148] sm:$0xff]
    %v66 = vld [vmem:[%s0 + $0x150] sm:$0xff]
    %v67 = vld [vmem:[%s0 + $0x158] sm:$0xff]
    %v68 = vld [vmem:[%s0 + $0x160] sm:$0xff]
    %v69 = vld [vmem:[%s0 + $0x168] sm:$0xff]
    %v70 = vld [vmem:[%s0 + $0x170] sm:$0xff]
    %v71 = vld [vmem:[%s0 + $0x178] sm:$0xff]
    %v72 = vld [vmem:[%s0 + $0x180] sm:$0xff]
    %v73 = vld [vmem:[%s0 + $0x188] sm:$0xff]
    %v74 = vld [vmem:[%s0 + $0x190] sm:$0xff]
    %v75 = vld [vmem:[%s0 + $0x198] sm:$0xff]
    %v76 = vld [vmem:[%s0 + $0x1a0] sm:$0xff]
    %v77 = vld [vmem:[%s0 + $0x1a8] sm:$0xff]
    %v78 = vld [vmem:[%s0 + $0x1b0] sm:$0xff]
    %v79 = vld [vmem:[%s0 + $0x1b8] sm:$0xff]
    %v80 = vld [vmem:[%s0 + $0x1c0] sm:$0xff]
    %v81 = vld [vmem:[%s0 + $0x1c8] sm:$0xff]
    %v82 = vld [vmem:[%s0 + $0x1d0] sm:$0xff]
    %v83 = vld [vmem:[%s0 + $0x1d8] sm:$0xff]
    %v84 = vld [vmem:[%s0 + $0x1e0] sm:$0xff]
    %v85 = vld [vmem:[%s0 + $0x1e8] sm:$0xff]
    %v86 = vld [vmem:[%s0 + $0x1f0] sm:$0xff]
    %v87 = vld [vmem:[%s0 + $0x1f8] sm:$0xff]
    %v88 = vld [vmem:[%s1] sm:$0xff]
    %v89 = vld [vmem:[%s1 + $0x8] sm:$0xff]
    %v90 = vld [vmem:[%s1 + $0x10] sm:$0xff]
    %v91 = vld [vmem:[%s1 + $0x18] sm:$0xff]
    %v92 = vld [vmem:[%s1 + $0x20] sm:$0xff]
    %vm93 = vcmask 326656
    %v95 = vsel %vm93, %v24, 0
    %v98 = vsel %vm93, %v25, 0
    %v101 = vsel %vm93, %v26, 0
    %v104 = vsel %vm93, %v27, 0
    %v107 = vsel %vm93, %v28, 0
    %v110 = vsel %vm93, %v29, 0
    %v113 = vsel %vm93, %v30, 0
    %v116 = vsel %vm93, %v31, 0
    %v119 = vsel %vm93, %v32, 0
    %v122 = vsel %vm93, %v33, 0
    %v125 = vsel %vm93, %v34, 0
    %v128 = vsel %vm93, %v35, 0
    %v131 = vsel %vm93, %v36, 0
    %v134 = vsel %vm93, %v37, 0
    %v137 = vsel %vm93, %v38, 0
    %v140 = vsel %vm93, %v39, 0
    %v143 = vsel %vm93, %v40, 0
    %v146 = vsel %vm93, %v41, 0
    %v149 = vsel %vm93, %v42, 0
    %v152 = vsel %vm93, %v43, 0
    %v155 = vsel %vm93, %v44, 0
    %v158 = vsel %vm93, %v45, 0
    %v161 = vsel %vm93, %v46, 0
    %v164 = vsel %vm93, %v47, 0
    %v167 = vsel %vm93, %v48, 0
    %v170 = vsel %vm93, %v49, 0
    %v173 = vsel %vm93, %v50, 0
    %v176 = vsel %vm93, %v51, 0
    %v179 = vsel %vm93, %v52, 0
    %v182 = vsel %vm93, %v53, 0
    %v185 = vsel %vm93, %v54, 0
    %v188 = vsel %vm93, %v55, 0
    %v191 = vsel %vm93, %v56, 0
    %v194 = vsel %vm93, %v57, 0
    %v197 = vsel %vm93, %v58, 0
    %v200 = vsel %vm93, %v59, 0
    %v203 = vsel %vm93, %v60, 0
    %v206 = vsel %vm93, %v61, 0
    %v209 = vsel %vm93, %v62, 0
    %v212 = vsel %vm93, %v63, 0
    %v215 = vsel %vm93, %v64, 0
    %v218 = vsel %vm93, %v65, 0
    %v221 = vsel %vm93, %v66, 0
    %v224 = vsel %vm93, %v67, 0
    %v227 = vsel %vm93, %v68, 0
    %v230 = vsel %vm93, %v69, 0
    %v233 = vsel %vm93, %v70, 0
    %v236 = vsel %vm93, %v71, 0
    %v239 = vsel %vm93, %v72, 0
    %v242 = vsel %vm93, %v73, 0
    %v245 = vsel %vm93, %v74, 0
    %v248 = vsel %vm93, %v75, 0
    %v251 = vsel %vm93, %v76, 0
    %v254 = vsel %vm93, %v77, 0
    %v257 = vsel %vm93, %v78, 0
    %v260 = vsel %vm93, %v79, 0
    %v263 = vsel %vm93, %v80, 0
    %v266 = vsel %vm93, %v81, 0
    %v269 = vsel %vm93, %v82, 0
    %v272 = vsel %vm93, %v83, 0
    %v275 = vsel %vm93, %v84, 0
    %v278 = vsel %vm93, %v85, 0
    %v281 = vsel %vm93, %v86, 0
    %v284 = vsel %vm93, %v87, 0
    %286 = vmatprep.subr.mxu0 0.0
    %287 = vmatpush1.msra.mxu0 %v88
    %288 = vmatprep.subr.mxu0 0.0
    %289 = vmatpush1.msra.mxu0 %v89
    %290 = vmatprep.subr.mxu0 0.0
    %291 = vmatpush1.msra.mxu0 %v90
    %292 = vmatprep.subr.mxu0 0.0
    %293 = vmatpush1.msra.mxu0 %v91
    %294 = vmatprep.subr.mxu0 0.0
    %295 = vmatpush1.msra.mxu0 %v92
    %296 = vmatprep.subr.mxu0 0.0
    %297 = vmatpush1.msra.mxu0 0.0
    %298 = vmatprep.subr.mxu0 0.0
    %299 = vmatpush1.msra.mxu0 0.0
    %300 = vmatprep.subr.mxu0 0.0
    %301 = vmatpush1.msra.mxu0 0.0
    %302 = vmatprep.subr.mxu0 0.0
    %303 = vmatpush1.msra.mxu0 0.0
    %304 = vmatprep.subr.mxu0 0.0
    %305 = vmatpush1.msra.mxu0 0.0
    %306 = vmatprep.subr.mxu0 0.0
    %307 = vmatpush1.msra.mxu0 0.0
    %308 = vmatprep.subr.mxu0 0.0
    %309 = vmatpush1.msra.mxu0 0.0
    %310 = vmatprep.subr.mxu0 0.0
    %311 = vmatpush1.msra.mxu0 0.0
    %312 = vmatprep.subr.mxu0 0.0
    %313 = vmatpush1.msra.mxu0 0.0
    %314 = vmatprep.subr.mxu0 0.0
    %315 = vmatpush1.msra.mxu0 0.0
    %316 = vmatprep.subr.mxu0 0.0
    %317 = vmatpush1.msra.mxu0 0.0
    %318 = vmatprep.subr.mxu0 0.0
    %319 = vmatpush1.msra.mxu0 0.0
    %320 = vmatprep.subr.mxu0 0.0
    %321 = vmatpush1.msra.mxu0 0.0
    %322 = vmatprep.subr.mxu0 0.0
    %323 = vmatpush1.msra.mxu0 0.0
    %324 = vmatprep.subr.mxu0 0.0
    %325 = vmatpush1.msra.mxu0 0.0
    %326 = vmatprep.subr.mxu0 0.0
    %327 = vmatpush1.msra.mxu0 0.0
    %328 = vmatprep.subr.mxu0 0.0
    %329 = vmatpush1.msra.mxu0 0.0
    %330 = vmatprep.subr.mxu0 0.0
    %331 = vmatpush1.msra.mxu0 0.0
    %332 = vmatprep.subr.mxu0 0.0
    %333 = vmatpush1.msra.mxu0 0.0
    %334 = vmatprep.subr.mxu0 0.0
    %335 = vmatpush1.msra.mxu0 0.0
    %336 = vmatprep.subr.mxu0 0.0
    %337 = vmatpush1.msra.mxu0 0.0
    %338 = vmatprep.subr.mxu0 0.0
    %339 = vmatpush1.msra.mxu0 0.0
    %340 = vmatprep.subr.mxu0 0.0
    %341 = vmatpush1.msra.mxu0 0.0
    %342 = vmatprep.subr.mxu0 0.0
    %343 = vmatpush1.msra.mxu0 0.0
    %344 = vmatprep.subr.mxu0 0.0
    %345 = vmatpush1.msra.mxu0 0.0
    %346 = vmatprep.subr.mxu0 0.0
    %347 = vmatpush1.msra.mxu0 0.0
    %348 = vmatprep.subr.mxu0 0.0
    %349 = vmatpush1.msra.mxu0 0.0
    %350 = vmatprep.mubr.f32.mxu0 0.0
    %351 = vmatmul.mubr.f32.gmra.mrb[0].mxu0 %v95
    %v352 = vpop.f32.mrb[0].mxu0
    %v353 = vadd.f32 0.0, %v352
    %v354 = vpop.f32.mrb[0].mxu0
    %355 = vmatprep.mubr.f32.mxu0 0.0
    %356 = vmatmul.mubr.f32.gmra.mrb[0].mxu0 %v98
    %v357 = vpop.f32.mrb[0].mxu0
    %v358 = vadd.f32 0.0, %v357
    %v359 = vpop.f32.mrb[0].mxu0
    %360 = vmatprep.mubr.f32.mxu0 0.0
    %361 = vmatmul.mubr.f32.gmra.mrb[0].mxu0 %v101
    %v362 = vpop.f32.mrb[0].mxu0
    %v363 = vadd.f32 0.0, %v362
    %v364 = vpop.f32.mrb[0].mxu0
    %365 = vmatprep.mubr.f32.mxu0 0.0
    %366 = vmatmul.mubr.f32.gmra.mrb[0].mxu0 %v104
    %v367 = vpop.f32.mrb[0].mxu0
    %v368 = vadd.f32 0.0, %v367
    %v369 = vpop.f32.mrb[0].mxu0
    %370 = vmatprep.mubr.f32.mxu0 0.0
    %371 = vmatmul.mubr.f32.gmra.mrb[0].mxu0 %v107
    %v372 = vpop.f32.mrb[0].mxu0
    %v373 = vadd.f32 0.0, %v372
    %v374 = vpop.f32.mrb[0].mxu0
    %375 = vmatprep.mubr.f32.mxu0 0.0
    %376 = vmatmul.mubr.f32.gmra.mrb[0].mxu0 %v110
    %v377 = vpop.f32.mrb[0].mxu0
    %v378 = vadd.f32 0.0, %v377
    %v379 = vpop.f32.mrb[0].mxu0
    %380 = vmatprep.mubr.f32.mxu0 0.0
    %381 = vmatmul.mubr.f32.gmra.mrb[0].mxu0 %v113
    %v382 = vpop.f32.mrb[0].mxu0
    %v383 = vadd.f32 0.0, %v382
    %v384 = vpop.f32.mrb[0].mxu0
    %385 = vmatprep.mubr.f32.mxu0 0.0
    %386 = vmatmul.mubr.f32.gmra.mrb[0].mxu0 %v116
    %v387 = vpop.f32.mrb[0].mxu0
    %v388 = vadd.f32 0.0, %v387
    %v389 = vpop.f32.mrb[0].mxu0
    %390 = vmatprep.mubr.f32.mxu0 0.0
    %391 = vmatmul.mubr.f32.gmra.mrb[0].mxu0 %v119
    %v392 = vpop.f32.mrb[0].mxu0
    %v393 = vadd.f32 0.0, %v392
    %v394 = vpop.f32.mrb[0].mxu0
    %395 = vmatprep.mubr.f32.mxu0 0.0
    %396 = vmatmul.mubr.f32.gmra.mrb[0].mxu0 %v122
    %v397 = vpop.f32.mrb[0].mxu0
    %v398 = vadd.f32 0.0, %v397
    %v399 = vpop.f32.mrb[0].mxu0
    %400 = vmatprep.mubr.f32.mxu0 0.0
    %401 = vmatmul.mubr.f32.gmra.mrb[0].mxu0 %v125
    %v402 = vpop.f32.mrb[0].mxu0
    %v403 = vadd.f32 0.0, %v402
    %v404 = vpop.f32.mrb[0].mxu0
    %405 = vmatprep.mubr.f32.mxu0 0.0
    %406 = vmatmul.mubr.f32.gmra.mrb[0].mxu0 %v128
    %v407 = vpop.f32.mrb[0].mxu0
    %v408 = vadd.f32 0.0, %v407
    %v409 = vpop.f32.mrb[0].mxu0
    %410 = vmatprep.mubr.f32.mxu0 0.0
    %411 = vmatmul.mubr.f32.gmra.mrb[0].mxu0 %v131
    %v412 = vpop.f32.mrb[0].mxu0
    %v413 = vadd.f32 0.0, %v412
    %v414 = vpop.f32.mrb[0].mxu0
    %415 = vmatprep.mubr.f32.mxu0 0.0
    %416 = vmatmul.mubr.f32.gmra.mrb[0].mxu0 %v134
    %v417 = vpop.f32.mrb[0].mxu0
    %v418 = vadd.f32 0.0, %v417
    %v419 = vpop.f32.mrb[0].mxu0
    %420 = vmatprep.mubr.f32.mxu0 0.0
    %421 = vmatmul.mubr.f32.gmra.mrb[0].mxu0 %v137
    %v422 = vpop.f32.mrb[0].mxu0
    %v423 = vadd.f32 0.0, %v422
    %v424 = vpop.f32.mrb[0].mxu0
    %425 = vmatprep.mubr.f32.mxu0 0.0
    %426 = vmatmul.mubr.f32.gmra.mrb[0].mxu0 %v140
    %v427 = vpop.f32.mrb[0].mxu0
    %v428 = vadd.f32 0.0, %v427
    %v429 = vpop.f32.mrb[0].mxu0
    %430 = vmatprep.mubr.f32.mxu0 0.0
    %431 = vmatmul.mubr.f32.gmra.mrb[0].mxu0 %v143
    %v432 = vpop.f32.mrb[0].mxu0
    %v433 = vadd.f32 0.0, %v432
    %v434 = vpop.f32.mrb[0].mxu0
    %435 = vmatprep.mubr.f32.mxu0 0.0
    %436 = vmatmul.mubr.f32.gmra.mrb[0].mxu0 %v146
    %v437 = vpop.f32.mrb[0].mxu0
    %v438 = vadd.f32 0.0, %v437
    %v439 = vpop.f32.mrb[0].mxu0
    %440 = vmatprep.mubr.f32.mxu0 0.0
    %441 = vmatmul.mubr.f32.gmra.mrb[0].mxu0 %v149
    %v442 = vpop.f32.mrb[0].mxu0
    %v443 = vadd.f32 0.0, %v442
    %v444 = vpop.f32.mrb[0].mxu0
    %445 = vmatprep.mubr.f32.mxu0 0.0
    %446 = vmatmul.mubr.f32.gmra.mrb[0].mxu0 %v152
    %v447 = vpop.f32.mrb[0].mxu0
    %v448 = vadd.f32 0.0, %v447
    %v449 = vpop.f32.mrb[0].mxu0
    %450 = vmatprep.mubr.f32.mxu0 0.0
    %451 = vmatmul.mubr.f32.gmra.mrb[0].mxu0 %v155
    %v452 = vpop.f32.mrb[0].mxu0
    %v453 = vadd.f32 0.0, %v452
    %v454 = vpop.f32.mrb[0].mxu0
    %455 = vmatprep.mubr.f32.mxu0 0.0
    %456 = vmatmul.mubr.f32.gmra.mrb[0].mxu0 %v158
    %v457 = vpop.f32.mrb[0].mxu0
    %v458 = vadd.f32 0.0, %v457
    %v459 = vpop.f32.mrb[0].mxu0
    %460 = vmatprep.mubr.f32.mxu0 0.0
    %461 = vmatmul.mubr.f32.gmra.mrb[0].mxu0 %v161
    %v462 = vpop.f32.mrb[0].mxu0
    %v463 = vadd.f32 0.0, %v462
    %v464 = vpop.f32.mrb[0].mxu0
    %465 = vmatprep.mubr.f32.mxu0 0.0
    %466 = vmatmul.mubr.f32.gmra.mrb[0].mxu0 %v164
    %v467 = vpop.f32.mrb[0].mxu0
    %v468 = vadd.f32 0.0, %v467
    %v469 = vpop.f32.mrb[0].mxu0
    %470 = vmatprep.mubr.f32.mxu0 0.0
    %471 = vmatmul.mubr.f32.gmra.mrb[0].mxu0 %v167
    %v472 = vpop.f32.mrb[0].mxu0
    %v473 = vadd.f32 0.0, %v472
    %v474 = vpop.f32.mrb[0].mxu0
    %475 = vmatprep.mubr.f32.mxu0 0.0
    %476 = vmatmul.mubr.f32.gmra.mrb[0].mxu0 %v170
    %v477 = vpop.f32.mrb[0].mxu0
    %v478 = vadd.f32 0.0, %v477
    %v479 = vpop.f32.mrb[0].mxu0
    %480 = vmatprep.mubr.f32.mxu0 0.0
    %481 = vmatmul.mubr.f32.gmra.mrb[0].mxu0 %v173
    %v482 = vpop.f32.mrb[0].mxu0
    %v483 = vadd.f32 0.0, %v482
    %v484 = vpop.f32.mrb[0].mxu0
    %485 = vmatprep.mubr.f32.mxu0 0.0
    %486 = vmatmul.mubr.f32.gmra.mrb[0].mxu0 %v176
    %v487 = vpop.f32.mrb[0].mxu0
    %v488 = vadd.f32 0.0, %v487
    %v489 = vpop.f32.mrb[0].mxu0
    %490 = vmatprep.mubr.f32.mxu0 0.0
    %491 = vmatmul.mubr.f32.gmra.mrb[0].mxu0 %v179
    %v492 = vpop.f32.mrb[0].mxu0
    %v493 = vadd.f32 0.0, %v492
    %v494 = vpop.f32.mrb[0].mxu0
    %495 = vmatprep.mubr.f32.mxu0 0.0
    %496 = vmatmul.mubr.f32.gmra.mrb[0].mxu0 %v182
    %v497 = vpop.f32.mrb[0].mxu0
    %v498 = vadd.f32 0.0, %v497
    %v499 = vpop.f32.mrb[0].mxu0
    %500 = vmatprep.mubr.f32.mxu0 0.0
    %501 = vmatmul.mubr.f32.gmra.mrb[0].mxu0 %v185
    %v502 = vpop.f32.mrb[0].mxu0
    %v503 = vadd.f32 0.0, %v502
    %v504 = vpop.f32.mrb[0].mxu0
    %505 = vmatprep.mubr.f32.mxu0 0.0
    %506 = vmatmul.mubr.f32.gmra.mrb[0].mxu0 %v188
    %v507 = vpop.f32.mrb[0].mxu0
    %v508 = vadd.f32 0.0, %v507
    %v509 = vpop.f32.mrb[0].mxu0
    %510 = vmatprep.mubr.f32.mxu0 0.0
    %511 = vmatmul.mubr.f32.gmra.mrb[0].mxu0 %v191
    %v512 = vpop.f32.mrb[0].mxu0
    %v513 = vadd.f32 0.0, %v512
    %v514 = vpop.f32.mrb[0].mxu0
    %515 = vmatprep.mubr.f32.mxu0 0.0
    %516 = vmatmul.mubr.f32.gmra.mrb[0].mxu0 %v194
    %v517 = vpop.f32.mrb[0].mxu0
    %v518 = vadd.f32 0.0, %v517
    %v519 = vpop.f32.mrb[0].mxu0
    %520 = vmatprep.mubr.f32.mxu0 0.0
    %521 = vmatmul.mubr.f32.gmra.mrb[0].mxu0 %v197
    %v522 = vpop.f32.mrb[0].mxu0
    %v523 = vadd.f32 0.0, %v522
    %v524 = vpop.f32.mrb[0].mxu0
    %525 = vmatprep.mubr.f32.mxu0 0.0
    %526 = vmatmul.mubr.f32.gmra.mrb[0].mxu0 %v200
    %v527 = vpop.f32.mrb[0].mxu0
    %v528 = vadd.f32 0.0, %v527
    %v529 = vpop.f32.mrb[0].mxu0
    %530 = vmatprep.mubr.f32.mxu0 0.0
    %531 = vmatmul.mubr.f32.gmra.mrb[0].mxu0 %v203
    %v532 = vpop.f32.mrb[0].mxu0
    %v533 = vadd.f32 0.0, %v532
    %v534 = vpop.f32.mrb[0].mxu0
    %535 = vmatprep.mubr.f32.mxu0 0.0
    %536 = vmatmul.mubr.f32.gmra.mrb[0].mxu0 %v206
    %v537 = vpop.f32.mrb[0].mxu0
    %v538 = vadd.f32 0.0, %v537
    %v539 = vpop.f32.mrb[0].mxu0
    %540 = vmatprep.mubr.f32.mxu0 0.0
    %541 = vmatmul.mubr.f32.gmra.mrb[0].mxu0 %v209
    %v542 = vpop.f32.mrb[0].mxu0
    %v543 = vadd.f32 0.0, %v542
    %v544 = vpop.f32.mrb[0].mxu0
    %545 = vmatprep.mubr.f32.mxu0 0.0
    %546 = vmatmul.mubr.f32.gmra.mrb[0].mxu0 %v212
    %v547 = vpop.f32.mrb[0].mxu0
    %v548 = vadd.f32 0.0, %v547
    %v549 = vpop.f32.mrb[0].mxu0
    %550 = vmatprep.mubr.f32.mxu0 0.0
    %551 = vmatmul.mubr.f32.gmra.mrb[0].mxu0 %v215
    %v552 = vpop.f32.mrb[0].mxu0
    %v553 = vadd.f32 0.0, %v552
    %v554 = vpop.f32.mrb[0].mxu0
    %555 = vmatprep.mubr.f32.mxu0 0.0
    %556 = vmatmul.mubr.f32.gmra.mrb[0].mxu0 %v218
    %v557 = vpop.f32.mrb[0].mxu0
    %v558 = vadd.f32 0.0, %v557
    %v559 = vpop.f32.mrb[0].mxu0
    %560 = vmatprep.mubr.f32.mxu0 0.0
    %561 = vmatmul.mubr.f32.gmra.mrb[0].mxu0 %v221
    %v562 = vpop.f32.mrb[0].mxu0
    %v563 = vadd.f32 0.0, %v562
    %v564 = vpop.f32.mrb[0].mxu0
    %565 = vmatprep.mubr.f32.mxu0 0.0
    %566 = vmatmul.mubr.f32.gmra.mrb[0].mxu0 %v224
    %v567 = vpop.f32.mrb[0].mxu0
    %v568 = vadd.f32 0.0, %v567
    %v569 = vpop.f32.mrb[0].mxu0
    %570 = vmatprep.mubr.f32.mxu0 0.0
    %571 = vmatmul.mubr.f32.gmra.mrb[0].mxu0 %v227
    %v572 = vpop.f32.mrb[0].mxu0
    %v573 = vadd.f32 0.0, %v572
    %v574 = vpop.f32.mrb[0].mxu0
    %575 = vmatprep.mubr.f32.mxu0 0.0
    %576 = vmatmul.mubr.f32.gmra.mrb[0].mxu0 %v230
    %v577 = vpop.f32.mrb[0].mxu0
    %v578 = vadd.f32 0.0, %v577
    %v579 = vpop.f32.mrb[0].mxu0
    %580 = vmatprep.mubr.f32.mxu0 0.0
    %581 = vmatmul.mubr.f32.gmra.mrb[0].mxu0 %v233
    %v582 = vpop.f32.mrb[0].mxu0
    %v583 = vadd.f32 0.0, %v582
    %v584 = vpop.f32.mrb[0].mxu0
    %585 = vmatprep.mubr.f32.mxu0 0.0
    %586 = vmatmul.mubr.f32.gmra.mrb[0].mxu0 %v236
    %v587 = vpop.f32.mrb[0].mxu0
    %v588 = vadd.f32 0.0, %v587
    %v589 = vpop.f32.mrb[0].mxu0
    %590 = vmatprep.mubr.f32.mxu0 0.0
    %591 = vmatmul.mubr.f32.gmra.mrb[0].mxu0 %v239
    %v592 = vpop.f32.mrb[0].mxu0
    %v593 = vadd.f32 0.0, %v592
    %v594 = vpop.f32.mrb[0].mxu0
    %595 = vmatprep.mubr.f32.mxu0 0.0
    %596 = vmatmul.mubr.f32.gmra.mrb[0].mxu0 %v242
    %v597 = vpop.f32.mrb[0].mxu0
    %v598 = vadd.f32 0.0, %v597
    %v599 = vpop.f32.mrb[0].mxu0
    %600 = vmatprep.mubr.f32.mxu0 0.0
    %601 = vmatmul.mubr.f32.gmra.mrb[0].mxu0 %v245
    %v602 = vpop.f32.mrb[0].mxu0
    %v603 = vadd.f32 0.0, %v602
    %v604 = vpop.f32.mrb[0].mxu0
    %605 = vmatprep.mubr.f32.mxu0 0.0
    %606 = vmatmul.mubr.f32.gmra.mrb[0].mxu0 %v248
    %v607 = vpop.f32.mrb[0].mxu0
    %v608 = vadd.f32 0.0, %v607
    %v609 = vpop.f32.mrb[0].mxu0
    %610 = vmatprep.mubr.f32.mxu0 0.0
    %611 = vmatmul.mubr.f32.gmra.mrb[0].mxu0 %v251
    %v612 = vpop.f32.mrb[0].mxu0
    %v613 = vadd.f32 0.0, %v612
    %v614 = vpop.f32.mrb[0].mxu0
    %615 = vmatprep.mubr.f32.mxu0 0.0
    %616 = vmatmul.mubr.f32.gmra.mrb[0].mxu0 %v254
    %v617 = vpop.f32.mrb[0].mxu0
    %v618 = vadd.f32 0.0, %v617
    %v619 = vpop.f32.mrb[0].mxu0
    %620 = vmatprep.mubr.f32.mxu0 0.0
    %621 = vmatmul.mubr.f32.gmra.mrb[0].mxu0 %v257
    %v622 = vpop.f32.mrb[0].mxu0
    %v623 = vadd.f32 0.0, %v622
    %v624 = vpop.f32.mrb[0].mxu0
    %625 = vmatprep.mubr.f32.mxu0 0.0
    %626 = vmatmul.mubr.f32.gmra.mrb[0].mxu0 %v260
    %v627 = vpop.f32.mrb[0].mxu0
    %v628 = vadd.f32 0.0, %v627
    %v629 = vpop.f32.mrb[0].mxu0
    %630 = vmatprep.mubr.f32.mxu0 0.0
    %631 = vmatmul.mubr.f32.gmra.mrb[0].mxu0 %v263
    %v632 = vpop.f32.mrb[0].mxu0
    %v633 = vadd.f32 0.0, %v632
    %v634 = vpop.f32.mrb[0].mxu0
    %635 = vmatprep.mubr.f32.mxu0 0.0
    %636 = vmatmul.mubr.f32.gmra.mrb[0].mxu0 %v266
    %v637 = vpop.f32.mrb[0].mxu0
    %v638 = vadd.f32 0.0, %v637
    %v639 = vpop.f32.mrb[0].mxu0
    %640 = vmatprep.mubr.f32.mxu0 0.0
    %641 = vmatmul.mubr.f32.gmra.mrb[0].mxu0 %v269
    %v642 = vpop.f32.mrb[0].mxu0
    %v643 = vadd.f32 0.0, %v642
    %v644 = vpop.f32.mrb[0].mxu0
    %645 = vmatprep.mubr.f32.mxu0 0.0
    %646 = vmatmul.mubr.f32.gmra.mrb[0].mxu0 %v272
    %v647 = vpop.f32.mrb[0].mxu0
    %v648 = vadd.f32 0.0, %v647
    %v649 = vpop.f32.mrb[0].mxu0
    %650 = vmatprep.mubr.f32.mxu0 0.0
    %651 = vmatmul.mubr.f32.gmra.mrb[0].mxu0 %v275
    %v652 = vpop.f32.mrb[0].mxu0
    %v653 = vadd.f32 0.0, %v652
    %v654 = vpop.f32.mrb[0].mxu0
    %655 = vmatprep.mubr.f32.mxu0 0.0
    %656 = vmatmul.mubr.f32.gmra.mrb[0].mxu0 %v278
    %v657 = vpop.f32.mrb[0].mxu0
    %v658 = vadd.f32 0.0, %v657
    %v659 = vpop.f32.mrb[0].mxu0
    %660 = vmatprep.mubr.f32.mxu0 0.0
    %661 = vmatmul.mubr.f32.gmra.mrb[0].mxu0 %v281
    %v662 = vpop.f32.mrb[0].mxu0
    %v663 = vadd.f32 0.0, %v662
    %v664 = vpop.f32.mrb[0].mxu0
    %665 = vmatprep.mubr.f32.mxu0 0.0
    %666 = vmatmul.mubr.f32.gmra.mrb[0].mxu0 %v284
    %v667 = vpop.f32.mrb[0].mxu0
    %v668 = vadd.f32 0.0, %v667
    %v669 = vpop.f32.mrb[0].mxu0
    %670 = vdwg.mxu0
    %s671 = smul.u32 0, 512
    %s672 = scalar_lea.vmem [#allocation4], %s671
    %673 = vst [vmem:[%s672] sm:$0xff] %v353
    %674 = vst [vmem:[%s672 + $0x8] sm:$0xff] %v358
    %675 = vst [vmem:[%s672 + $0x10] sm:$0xff] %v363
    %676 = vst [vmem:[%s672 + $0x18] sm:$0xff] %v368
    %677 = vst [vmem:[%s672 + $0x20] sm:$0xff] %v373
    %678 = vst [vmem:[%s672 + $0x28] sm:$0xff] %v378
    %679 = vst [vmem:[%s672 + $0x30] sm:$0xff] %v383
    %680 = vst [vmem:[%s672 + $0x38] sm:$0xff] %v388
    %681 = vst [vmem:[%s672 + $0x40] sm:$0xff] %v393
    %682 = vst [vmem:[%s672 + $0x48] sm:$0xff] %v398
    %683 = vst [vmem:[%s672 + $0x50] sm:$0xff] %v403
    %684 = vst [vmem:[%s672 + $0x58] sm:$0xff] %v408
    %685 = vst [vmem:[%s672 + $0x60] sm:$0xff] %v413
    %686 = vst [vmem:[%s672 + $0x68] sm:$0xff] %v418
    %687 = vst [vmem:[%s672 + $0x70] sm:$0xff] %v423
    %688 = vst [vmem:[%s672 + $0x78] sm:$0xff] %v428
    %689 = vst [vmem:[%s672 + $0x80] sm:$0xff] %v433
    %690 = vst [vmem:[%s672 + $0x88] sm:$0xff] %v438
    %691 = vst [vmem:[%s672 + $0x90] sm:$0xff] %v443
    %692 = vst [vmem:[%s672 + $0x98] sm:$0xff] %v448
    %693 = vst [vmem:[%s672 + $0xa0] sm:$0xff] %v453
    %694 = vst [vmem:[%s672 + $0xa8] sm:$0xff] %v458
    %695 = vst [vmem:[%s672 + $0xb0] sm:$0xff] %v463
    %696 = vst [vmem:[%s672 + $0xb8] sm:$0xff] %v468
    %697 = vst [vmem:[%s672 + $0xc0] sm:$0xff] %v473
    %698 = vst [vmem:[%s672 + $0xc8] sm:$0xff] %v478
    %699 = vst [vmem:[%s672 + $0xd0] sm:$0xff] %v483
    %700 = vst [vmem:[%s672 + $0xd8] sm:$0xff] %v488
    %701 = vst [vmem:[%s672 + $0xe0] sm:$0xff] %v493
    %702 = vst [vmem:[%s672 + $0xe8] sm:$0xff] %v498
    %703 = vst [vmem:[%s672 + $0xf0] sm:$0xff] %v503
    %704 = vst [vmem:[%s672 + $0xf8] sm:$0xff] %v508
    %705 = vst [vmem:[%s672 + $0x100] sm:$0xff] %v513
    %706 = vst [vmem:[%s672 + $0x108] sm:$0xff] %v518
    %707 = vst [vmem:[%s672 + $0x110] sm:$0xff] %v523
    %708 = vst [vmem:[%s672 + $0x118] sm:$0xff] %v528
    %709 = vst [vmem:[%s672 + $0x120] sm:$0xff] %v533
    %710 = vst [vmem:[%s672 + $0x128] sm:$0xff] %v538
    %711 = vst [vmem:[%s672 + $0x130] sm:$0xff] %v543
    %712 = vst [vmem:[%s672 + $0x138] sm:$0xff] %v548
    %713 = vst [vmem:[%s672 + $0x140] sm:$0xff] %v553
    %714 = vst [vmem:[%s672 + $0x148] sm:$0xff] %v558
    %715 = vst [vmem:[%s672 + $0x150] sm:$0xff] %v563
    %716 = vst [vmem:[%s672 + $0x158] sm:$0xff] %v568
    %717 = vst [vmem:[%s672 + $0x160] sm:$0xff] %v573
    %718 = vst [vmem:[%s672 + $0x168] sm:$0xff] %v578
    %719 = vst [vmem:[%s672 + $0x170] sm:$0xff] %v583
    %720 = vst [vmem:[%s672 + $0x178] sm:$0xff] %v588
    %721 = vst [vmem:[%s672 + $0x180] sm:$0xff] %v593
    %722 = vst [vmem:[%s672 + $0x188] sm:$0xff] %v598
    %723 = vst [vmem:[%s672 + $0x190] sm:$0xff] %v603
    %724 = vst [vmem:[%s672 + $0x198] sm:$0xff] %v608
    %725 = vst [vmem:[%s672 + $0x1a0] sm:$0xff] %v613
    %726 = vst [vmem:[%s672 + $0x1a8] sm:$0xff] %v618
    %727 = vst [vmem:[%s672 + $0x1b0] sm:$0xff] %v623
    %728 = vst [vmem:[%s672 + $0x1b8] sm:$0xff] %v628
    %729 = vst [vmem:[%s672 + $0x1c0] sm:$0xff] %v633
    %730 = vst [vmem:[%s672 + $0x1c8] sm:$0xff] %v638
    %731 = vst [vmem:[%s672 + $0x1d0] sm:$0xff] %v643
    %732 = vst [vmem:[%s672 + $0x1d8] sm:$0xff] %v648
    %733 = vst [vmem:[%s672 + $0x1e0] sm:$0xff] %v653
    %734 = vst [vmem:[%s672 + $0x1e8] sm:$0xff] %v658
    %735 = vst [vmem:[%s672 + $0x1f0] sm:$0xff] %v663
    %736 = vst [vmem:[%s672 + $0x1f8] sm:$0xff] %v668
    %v737 = vld [vmem:[#allocation2] sm:$0x1]
    %v738 = vadd.f32 %v353, %v358
    %v739 = vadd.f32 %v738, %v363
    %v740 = vadd.f32 %v739, %v368
    %v741 = vadd.f32 %v740, %v373
    %v742 = vadd.f32 %v741, %v378
    %v743 = vadd.f32 %v742, %v383
    %v744 = vadd.f32 %v743, %v388
    %v745 = vadd.f32 %v744, %v393
    %v746 = vadd.f32 %v745, %v398
    %v747 = vadd.f32 %v746, %v403
    %v748 = vadd.f32 %v747, %v408
    %v749 = vadd.f32 %v748, %v413
    %v750 = vadd.f32 %v749, %v418
    %v751 = vadd.f32 %v750, %v423
    %v752 = vadd.f32 %v751, %v428
    %v753 = vadd.f32 %v752, %v433
    %v754 = vadd.f32 %v753, %v438
    %v755 = vadd.f32 %v754, %v443
    %v756 = vadd.f32 %v755, %v448
    %v757 = vadd.f32 %v756, %v453
    %v758 = vadd.f32 %v757, %v458
    %v759 = vadd.f32 %v758, %v463
    %v760 = vadd.f32 %v759, %v468
    %v761 = vadd.f32 %v760, %v473
    %v762 = vadd.f32 %v761, %v478
    %v763 = vadd.f32 %v762, %v483
    %v764 = vadd.f32 %v763, %v488
    %v765 = vadd.f32 %v764, %v493
    %v766 = vadd.f32 %v765, %v498
    %v767 = vadd.f32 %v766, %v503
    %v768 = vadd.f32 %v767, %v508
    %v769 = vadd.f32 %v768, %v513
    %v770 = vadd.f32 %v769, %v518
    %v771 = vadd.f32 %v770, %v523
    %v772 = vadd.f32 %v771, %v528
    %v773 = vadd.f32 %v772, %v533
    %v774 = vadd.f32 %v773, %v538
    %v775 = vadd.f32 %v774, %v543
    %v776 = vadd.f32 %v775, %v548
    %v777 = vadd.f32 %v776, %v553
    %v778 = vadd.f32 %v777, %v558
    %v779 = vadd.f32 %v778, %v563
    %v780 = vadd.f32 %v779, %v568
    %v781 = vadd.f32 %v780, %v573
    %v782 = vadd.f32 %v781, %v578
    %v783 = vadd.f32 %v782, %v583
    %v784 = vadd.f32 %v783, %v588
    %v785 = vadd.f32 %v784, %v593
    %v786 = vadd.f32 %v785, %v598
    %v787 = vadd.f32 %v786, %v603
    %v788 = vadd.f32 %v787, %v608
    %v789 = vadd.f32 %v788, %v613
    %v790 = vadd.f32 %v789, %v618
    %v791 = vadd.f32 %v790, %v623
    %v792 = vadd.f32 %v791, %v628
    %v793 = vadd.f32 %v792, %v633
    %v794 = vadd.f32 %v793, %v638
    %v795 = vadd.f32 %v794, %v643
    %v796 = vadd.f32 %v795, %v648
    %v797 = vadd.f32 %v796, %v653
    %v798 = vadd.f32 %v797, %v658
    %v799 = vadd.f32 %v798, %v663
    %v800 = vadd.f32 %v799, %v668
    %v801 = vrot.slane %v800, 4
    %v802 = vadd.f32 %v800, %v801
    %v803 = vrot.slane %v802, 2
    %v804 = vadd.f32 %v802, %v803
    %v805 = vrot.slane %v804, 1
    %v806 = vadd.f32 %v804, %v805
    %v807 = vadd.f32 %v737, %v806
    %808 = vst [vmem:[#allocation2] sm:$0x1] %v807
    %v809 = vld [vmem:[#allocation3] sm:$0x1]
    %v810 = vmul.f32 %v353, %v353
    %v811 = vmul.f32 %v358, %v358
    %v812 = vmul.f32 %v363, %v363
    %v813 = vmul.f32 %v368, %v368
    %v814 = vmul.f32 %v373, %v373
    %v815 = vmul.f32 %v378, %v378
    %v816 = vmul.f32 %v383, %v383
    %v817 = vmul.f32 %v388, %v388
    %v818 = vmul.f32 %v393, %v393
    %v819 = vmul.f32 %v398, %v398
    %v820 = vmul.f32 %v403, %v403
    %v821 = vmul.f32 %v408, %v408
    %v822 = vmul.f32 %v413, %v413
    %v823 = vmul.f32 %v418, %v418
    %v824 = vmul.f32 %v423, %v423
    %v825 = vmul.f32 %v428, %v428
    %v826 = vmul.f32 %v433, %v433
    %v827 = vmul.f32 %v438, %v438
    %v828 = vmul.f32 %v443, %v443
    %v829 = vmul.f32 %v448, %v448
    %v830 = vmul.f32 %v453, %v453
    %v831 = vmul.f32 %v458, %v458
    %v832 = vmul.f32 %v463, %v463
    %v833 = vmul.f32 %v468, %v468
    %v834 = vmul.f32 %v473, %v473
    %v835 = vmul.f32 %v478, %v478
    %v836 = vmul.f32 %v483, %v483
    %v837 = vmul.f32 %v488, %v488
    %v838 = vmul.f32 %v493, %v493
    %v839 = vmul.f32 %v498, %v498
    %v840 = vmul.f32 %v503, %v503
    %v841 = vmul.f32 %v508, %v508
    %v842 = vmul.f32 %v513, %v513
    %v843 = vmul.f32 %v518, %v518
    %v844 = vmul.f32 %v523, %v523
    %v845 = vmul.f32 %v528, %v528
    %v846 = vmul.f32 %v533, %v533
    %v847 = vmul.f32 %v538, %v538
    %v848 = vmul.f32 %v543, %v543
    %v849 = vmul.f32 %v548, %v548
    %v850 = vmul.f32 %v553, %v553
    %v851 = vmul.f32 %v558, %v558
    %v852 = vmul.f32 %v563, %v563
    %v853 = vmul.f32 %v568, %v568
    %v854 = vmul.f32 %v573, %v573
    %v855 = vmul.f32 %v578, %v578
    %v856 = vmul.f32 %v583, %v583
    %v857 = vmul.f32 %v588, %v588
    %v858 = vmul.f32 %v593, %v593
    %v859 = vmul.f32 %v598, %v598
    %v860 = vmul.f32 %v603, %v603
    %v861 = vmul.f32 %v608, %v608
    %v862 = vmul.f32 %v613, %v613
    %v863 = vmul.f32 %v618, %v618
    %v864 = vmul.f32 %v623, %v623
    %v865 = vmul.f32 %v628, %v628
    %v866 = vmul.f32 %v633, %v633
    %v867 = vmul.f32 %v638, %v638
    %v868 = vmul.f32 %v643, %v643
    %v869 = vmul.f32 %v648, %v648
    %v870 = vmul.f32 %v653, %v653
    %v871 = vmul.f32 %v658, %v658
    %v872 = vmul.f32 %v663, %v663
    %v873 = vmul.f32 %v668, %v668
    %v874 = vadd.f32 %v810, %v811
    %v875 = vadd.f32 %v874, %v812
    %v876 = vadd.f32 %v875, %v813
    %v877 = vadd.f32 %v876, %v814
    %v878 = vadd.f32 %v877, %v815
    %v879 = vadd.f32 %v878, %v816
    %v880 = vadd.f32 %v879, %v817
    %v881 = vadd.f32 %v880, %v818
    %v882 = vadd.f32 %v881, %v819
    %v883 = vadd.f32 %v882, %v820
    %v884 = vadd.f32 %v883, %v821
    %v885 = vadd.f32 %v884, %v822
    %v886 = vadd.f32 %v885, %v823
    %v887 = vadd.f32 %v886, %v824
    %v888 = vadd.f32 %v887, %v825
    %v889 = vadd.f32 %v888, %v826
    %v890 = vadd.f32 %v889, %v827
    %v891 = vadd.f32 %v890, %v828
    %v892 = vadd.f32 %v891, %v829
    %v893 = vadd.f32 %v892, %v830
    %v894 = vadd.f32 %v893, %v831
    %v895 = vadd.f32 %v894, %v832
    %v896 = vadd.f32 %v895, %v833
    %v897 = vadd.f32 %v896, %v834
    %v898 = vadd.f32 %v897, %v835
    %v899 = vadd.f32 %v898, %v836
    %v900 = vadd.f32 %v899, %v837
    %v901 = vadd.f32 %v900, %v838
    %v902 = vadd.f32 %v901, %v839
    %v903 = vadd.f32 %v902, %v840
    %v904 = vadd.f32 %v903, %v841
    %v905 = vadd.f32 %v904, %v842
    %v906 = vadd.f32 %v905, %v843
    %v907 = vadd.f32 %v906, %v844
    %v908 = vadd.f32 %v907, %v845
    %v909 = vadd.f32 %v908, %v846
    %v910 = vadd.f32 %v909, %v847
    %v911 = vadd.f32 %v910, %v848
    %v912 = vadd.f32 %v911, %v849
    %v913 = vadd.f32 %v912, %v850
    %v914 = vadd.f32 %v913, %v851
    %v915 = vadd.f32 %v914, %v852
    %v916 = vadd.f32 %v915, %v853
    %v917 = vadd.f32 %v916, %v854
    %v918 = vadd.f32 %v917, %v855
    %v919 = vadd.f32 %v918, %v856
    %v920 = vadd.f32 %v919, %v857
    %v921 = vadd.f32 %v920, %v858
    %v922 = vadd.f32 %v921, %v859
    %v923 = vadd.f32 %v922, %v860
    %v924 = vadd.f32 %v923, %v861
    %v925 = vadd.f32 %v924, %v862
    %v926 = vadd.f32 %v925, %v863
    %v927 = vadd.f32 %v926, %v864
    %v928 = vadd.f32 %v927, %v865
    %v929 = vadd.f32 %v928, %v866
    %v930 = vadd.f32 %v929, %v867
    %v931 = vadd.f32 %v930, %v868
    %v932 = vadd.f32 %v931, %v869
    %v933 = vadd.f32 %v932, %v870
    %v934 = vadd.f32 %v933, %v871
    %v935 = vadd.f32 %v934, %v872
    %v936 = vadd.f32 %v935, %v873
    %v937 = vrot.slane %v936, 4
    %v938 = vadd.f32 %v936, %v937
    %v939 = vrot.slane %v938, 2
    %v940 = vadd.f32 %v938, %v939
    %v941 = vrot.slane %v940, 1
    %v942 = vadd.f32 %v940, %v941
    %v943 = vadd.f32 %v809, %v942
    %944 = vst [vmem:[#allocation3] sm:$0x1] %v943
    // Predicated region
    $region22: #{tpu_custom_call.1} parent=1 // pred_check
      %p945 = pneg %p18
    $region23: #{tpu_custom_call.1} parent=1 // pred_check_branch
      %947 = sbr.rel (%p945) target = $region25
    $region24: #{tpu_custom_call.1} parent=1 // pred_region
      %v948 = vld [vmem:[#allocation2] sm:$0x1]
      %v949 = vmul.f32 %v948, 0.001953125
      %v950 = vld [vmem:[#allocation3] sm:$0x1]
      %v951 = vmul.f32 %v950, 0.001953125
      %v952 = vmul.f32 %v949, %v949
      %v953 = vsub.f32 %v951, %v952
      %v954 = vmax.f32 %v953, 0.0
      %v955 = vadd.f32 %v954, 1e-05
      %v956 = vrsqrt.pop %v955
      %v957 = vld [vmem:[%s2] sm:$0x1]
      %v958 = vmul.f32 %v957, %v956
      %v959 = vld [vmem:[%s3] sm:$0x1]
      %v960 = vmul.f32 %v949, %v958
      %v961 = vsub.f32 %v959, %v960
      %v962 = vld [vmem:[#allocation4] sm:$0xff]
      %v963 = vld [vmem:[#allocation4 + $0x8] sm:$0xff]
      %v964 = vld [vmem:[#allocation4 + $0x10] sm:$0xff]
      %v965 = vld [vmem:[#allocation4 + $0x18] sm:$0xff]
      %v966 = vld [vmem:[#allocation4 + $0x20] sm:$0xff]
      %v967 = vld [vmem:[#allocation4 + $0x28] sm:$0xff]
      %v968 = vld [vmem:[#allocation4 + $0x30] sm:$0xff]
      %v969 = vld [vmem:[#allocation4 + $0x38] sm:$0xff]
      %v970 = vld [vmem:[#allocation4 + $0x40] sm:$0xff]
      %v971 = vld [vmem:[#allocation4 + $0x48] sm:$0xff]
      %v972 = vld [vmem:[#allocation4 + $0x50] sm:$0xff]
      %v973 = vld [vmem:[#allocation4 + $0x58] sm:$0xff]
      %v974 = vld [vmem:[#allocation4 + $0x60] sm:$0xff]
      %v975 = vld [vmem:[#allocation4 + $0x68] sm:$0xff]
      %v976 = vld [vmem:[#allocation4 + $0x70] sm:$0xff]
      %v977 = vld [vmem:[#allocation4 + $0x78] sm:$0xff]
      %v978 = vld [vmem:[#allocation4 + $0x80] sm:$0xff]
      %v979 = vld [vmem:[#allocation4 + $0x88] sm:$0xff]
      %v980 = vld [vmem:[#allocation4 + $0x90] sm:$0xff]
      %v981 = vld [vmem:[#allocation4 + $0x98] sm:$0xff]
      %v982 = vld [vmem:[#allocation4 + $0xa0] sm:$0xff]
      %v983 = vld [vmem:[#allocation4 + $0xa8] sm:$0xff]
      %v984 = vld [vmem:[#allocation4 + $0xb0] sm:$0xff]
      %v985 = vld [vmem:[#allocation4 + $0xb8] sm:$0xff]
      %v986 = vld [vmem:[#allocation4 + $0xc0] sm:$0xff]
      %v987 = vld [vmem:[#allocation4 + $0xc8] sm:$0xff]
      %v988 = vld [vmem:[#allocation4 + $0xd0] sm:$0xff]
      %v989 = vld [vmem:[#allocation4 + $0xd8] sm:$0xff]
      %v990 = vld [vmem:[#allocation4 + $0xe0] sm:$0xff]
      %v991 = vld [vmem:[#allocation4 + $0xe8] sm:$0xff]
      %v992 = vld [vmem:[#allocation4 + $0xf0] sm:$0xff]
      %v993 = vld [vmem:[#allocation4 + $0xf8] sm:$0xff]
      %v994 = vld [vmem:[#allocation4 + $0x100] sm:$0xff]
      %v995 = vld [vmem:[#allocation4 + $0x108] sm:$0xff]
      %v996 = vld [vmem:[#allocation4 + $0x110] sm:$0xff]
      %v997 = vld [vmem:[#allocation4 + $0x118] sm:$0xff]
      %v998 = vld [vmem:[#allocation4 + $0x120] sm:$0xff]
      %v999 = vld [vmem:[#allocation4 + $0x128] sm:$0xff]
      %v1000 = vld [vmem:[#allocation4 + $0x130] sm:$0xff]
      %v1001 = vld [vmem:[#allocation4 + $0x138] sm:$0xff]
      %v1002 = vld [vmem:[#allocation4 + $0x140] sm:$0xff]
      %v1003 = vld [vmem:[#allocation4 + $0x148] sm:$0xff]
      %v1004 = vld [vmem:[#allocation4 + $0x150] sm:$0xff]
      %v1005 = vld [vmem:[#allocation4 + $0x158] sm:$0xff]
      %v1006 = vld [vmem:[#allocation4 + $0x160] sm:$0xff]
      %v1007 = vld [vmem:[#allocation4 + $0x168] sm:$0xff]
      %v1008 = vld [vmem:[#allocation4 + $0x170] sm:$0xff]
      %v1009 = vld [vmem:[#allocation4 + $0x178] sm:$0xff]
      %v1010 = vld [vmem:[#allocation4 + $0x180] sm:$0xff]
      %v1011 = vld [vmem:[#allocation4 + $0x188] sm:$0xff]
      %v1012 = vld [vmem:[#allocation4 + $0x190] sm:$0xff]
      %v1013 = vld [vmem:[#allocation4 + $0x198] sm:$0xff]
      %v1014 = vld [vmem:[#allocation4 + $0x1a0] sm:$0xff]
      %v1015 = vld [vmem:[#allocation4 + $0x1a8] sm:$0xff]
      %v1016 = vld [vmem:[#allocation4 + $0x1b0] sm:$0xff]
      %v1017 = vld [vmem:[#allocation4 + $0x1b8] sm:$0xff]
      %v1018 = vld [vmem:[#allocation4 + $0x1c0] sm:$0xff]
      %v1019 = vld [vmem:[#allocation4 + $0x1c8] sm:$0xff]
      %v1020 = vld [vmem:[#allocation4 + $0x1d0] sm:$0xff]
      %v1021 = vld [vmem:[#allocation4 + $0x1d8] sm:$0xff]
      %v1022 = vld [vmem:[#allocation4 + $0x1e0] sm:$0xff]
      %v1023 = vld [vmem:[#allocation4 + $0x1e8] sm:$0xff]
      %v1024 = vld [vmem:[#allocation4 + $0x1f0] sm:$0xff]
      %v1025 = vld [vmem:[#allocation4 + $0x1f8] sm:$0xff]
      %v1027 = vlaneseq
      %v1028 = vshrl.u32 %v1027, 7
      %v1029 = vsub.s32 0, %v1028
      %v1030 = vrot.slane %v958, %v1029
      %v1032 = vmul.f32 %v962, %v1030
      %v1033 = vmul.f32 %v963, %v1030
      %v1034 = vmul.f32 %v964, %v1030
      %v1035 = vmul.f32 %v965, %v1030
      %v1036 = vmul.f32 %v966, %v1030
      %v1037 = vmul.f32 %v967, %v1030
      %v1038 = vmul.f32 %v968, %v1030
      %v1039 = vmul.f32 %v969, %v1030
      %v1040 = vmul.f32 %v970, %v1030
      %v1041 = vmul.f32 %v971, %v1030
      %v1042 = vmul.f32 %v972, %v1030
      %v1043 = vmul.f32 %v973, %v1030
      %v1044 = vmul.f32 %v974, %v1030
      %v1045 = vmul.f32 %v975, %v1030
      %v1046 = vmul.f32 %v976, %v1030
      %v1047 = vmul.f32 %v977, %v1030
      %v1048 = vmul.f32 %v978, %v1030
      %v1049 = vmul.f32 %v979, %v1030
      %v1050 = vmul.f32 %v980, %v1030
      %v1051 = vmul.f32 %v981, %v1030
      %v1052 = vmul.f32 %v982, %v1030
      %v1053 = vmul.f32 %v983, %v1030
      %v1054 = vmul.f32 %v984, %v1030
      %v1055 = vmul.f32 %v985, %v1030
      %v1056 = vmul.f32 %v986, %v1030
      %v1057 = vmul.f32 %v987, %v1030
      %v1058 = vmul.f32 %v988, %v1030
      %v1059 = vmul.f32 %v989, %v1030
      %v1060 = vmul.f32 %v990, %v1030
      %v1061 = vmul.f32 %v991, %v1030
      %v1062 = vmul.f32 %v992, %v1030
      %v1063 = vmul.f32 %v993, %v1030
      %v1064 = vmul.f32 %v994, %v1030
      %v1065 = vmul.f32 %v995, %v1030
      %v1066 = vmul.f32 %v996, %v1030
      %v1067 = vmul.f32 %v997, %v1030
      %v1068 = vmul.f32 %v998, %v1030
      %v1069 = vmul.f32 %v999, %v1030
      %v1070 = vmul.f32 %v1000, %v1030
      %v1071 = vmul.f32 %v1001, %v1030
      %v1072 = vmul.f32 %v1002, %v1030
      %v1073 = vmul.f32 %v1003, %v1030
      %v1074 = vmul.f32 %v1004, %v1030
      %v1075 = vmul.f32 %v1005, %v1030
      %v1076 = vmul.f32 %v1006, %v1030
      %v1077 = vmul.f32 %v1007, %v1030
      %v1078 = vmul.f32 %v1008, %v1030
      %v1079 = vmul.f32 %v1009, %v1030
      %v1080 = vmul.f32 %v1010, %v1030
      %v1081 = vmul.f32 %v1011, %v1030
      %v1082 = vmul.f32 %v1012, %v1030
      %v1083 = vmul.f32 %v1013, %v1030
      %v1084 = vmul.f32 %v1014, %v1030
      %v1085 = vmul.f32 %v1015, %v1030
      %v1086 = vmul.f32 %v1016, %v1030
      %v1087 = vmul.f32 %v1017, %v1030
      %v1088 = vmul.f32 %v1018, %v1030
      %v1089 = vmul.f32 %v1019, %v1030
      %v1090 = vmul.f32 %v1020, %v1030
      %v1091 = vmul.f32 %v1021, %v1030
      %v1092 = vmul.f32 %v1022, %v1030
      %v1093 = vmul.f32 %v1023, %v1030
      %v1094 = vmul.f32 %v1024, %v1030
      %v1095 = vmul.f32 %v1025, %v1030
      %v1097 = vlaneseq
      %v1098 = vshrl.u32 %v1097, 7
      %v1099 = vsub.s32 0, %v1098
      %v1100 = vrot.slane %v961, %v1099
      %v1102 = vadd.f32 %v1032, %v1100
      %v1103 = vadd.f32 %v1033, %v1100
      %v1104 = vadd.f32 %v1034, %v1100
      %v1105 = vadd.f32 %v1035, %v1100
      %v1106 = vadd.f32 %v1036, %v1100
      %v1107 = vadd.f32 %v1037, %v1100
      %v1108 = vadd.f32 %v1038, %v1100
      %v1109 = vadd.f32 %v1039, %v1100
      %v1110 = vadd.f32 %v1040, %v1100
      %v1111 = vadd.f32 %v1041, %v1100
      %v1112 = vadd.f32 %v1042, %v1100
      %v1113 = vadd.f32 %v1043, %v1100
      %v1114 = vadd.f32 %v1044, %v1100
      %v1115 = vadd.f32 %v1045, %v1100
      %v1116 = vadd.f32 %v1046, %v1100
      %v1117 = vadd.f32 %v1047, %v1100
      %v1118 = vadd.f32 %v1048, %v1100
      %v1119 = vadd.f32 %v1049, %v1100
      %v1120 = vadd.f32 %v1050, %v1100
      %v1121 = vadd.f32 %v1051, %v1100
      %v1122 = vadd.f32 %v1052, %v1100
      %v1123 = vadd.f32 %v1053, %v1100
      %v1124 = vadd.f32 %v1054, %v1100
      %v1125 = vadd.f32 %v1055, %v1100
      %v1126 = vadd.f32 %v1056, %v1100
      %v1127 = vadd.f32 %v1057, %v1100
      %v1128 = vadd.f32 %v1058, %v1100
      %v1129 = vadd.f32 %v1059, %v1100
      %v1130 = vadd.f32 %v1060, %v1100
      %v1131 = vadd.f32 %v1061, %v1100
      %v1132 = vadd.f32 %v1062, %v1100
      %v1133 = vadd.f32 %v1063, %v1100
      %v1134 = vadd.f32 %v1064, %v1100
      %v1135 = vadd.f32 %v1065, %v1100
      %v1136 = vadd.f32 %v1066, %v1100
      %v1137 = vadd.f32 %v1067, %v1100
      %v1138 = vadd.f32 %v1068, %v1100
      %v1139 = vadd.f32 %v1069, %v1100
      %v1140 = vadd.f32 %v1070, %v1100
      %v1141 = vadd.f32 %v1071, %v1100
      %v1142 = vadd.f32 %v1072, %v1100
      %v1143 = vadd.f32 %v1073, %v1100
      %v1144 = vadd.f32 %v1074, %v1100
      %v1145 = vadd.f32 %v1075, %v1100
      %v1146 = vadd.f32 %v1076, %v1100
      %v1147 = vadd.f32 %v1077, %v1100
      %v1148 = vadd.f32 %v1078, %v1100
      %v1149 = vadd.f32 %v1079, %v1100
      %v1150 = vadd.f32 %v1080, %v1100
      %v1151 = vadd.f32 %v1081, %v1100
      %v1152 = vadd.f32 %v1082, %v1100
      %v1153 = vadd.f32 %v1083, %v1100
      %v1154 = vadd.f32 %v1084, %v1100
      %v1155 = vadd.f32 %v1085, %v1100
      %v1156 = vadd.f32 %v1086, %v1100
      %v1157 = vadd.f32 %v1087, %v1100
      %v1158 = vadd.f32 %v1088, %v1100
      %v1159 = vadd.f32 %v1089, %v1100
      %v1160 = vadd.f32 %v1090, %v1100
      %v1161 = vadd.f32 %v1091, %v1100
      %v1162 = vadd.f32 %v1092, %v1100
      %v1163 = vadd.f32 %v1093, %v1100
      %v1164 = vadd.f32 %v1094, %v1100
      %v1165 = vadd.f32 %v1095, %v1100
      %v1166 = vmax.f32 %v1102, 0.0
      %v1167 = vmax.f32 %v1103, 0.0
      %v1168 = vmax.f32 %v1104, 0.0
      %v1169 = vmax.f32 %v1105, 0.0
      %v1170 = vmax.f32 %v1106, 0.0
      %v1171 = vmax.f32 %v1107, 0.0
      %v1172 = vmax.f32 %v1108, 0.0
      %v1173 = vmax.f32 %v1109, 0.0
      %v1174 = vmax.f32 %v1110, 0.0
      %v1175 = vmax.f32 %v1111, 0.0
      %v1176 = vmax.f32 %v1112, 0.0
      %v1177 = vmax.f32 %v1113, 0.0
      %v1178 = vmax.f32 %v1114, 0.0
      %v1179 = vmax.f32 %v1115, 0.0
      %v1180 = vmax.f32 %v1116, 0.0
      %v1181 = vmax.f32 %v1117, 0.0
      %v1182 = vmax.f32 %v1118, 0.0
      %v1183 = vmax.f32 %v1119, 0.0
      %v1184 = vmax.f32 %v1120, 0.0
      %v1185 = vmax.f32 %v1121, 0.0
      %v1186 = vmax.f32 %v1122, 0.0
      %v1187 = vmax.f32 %v1123, 0.0
      %v1188 = vmax.f32 %v1124, 0.0
      %v1189 = vmax.f32 %v1125, 0.0
      %v1190 = vmax.f32 %v1126, 0.0
      %v1191 = vmax.f32 %v1127, 0.0
      %v1192 = vmax.f32 %v1128, 0.0
      %v1193 = vmax.f32 %v1129, 0.0
      %v1194 = vmax.f32 %v1130, 0.0
      %v1195 = vmax.f32 %v1131, 0.0
      %v1196 = vmax.f32 %v1132, 0.0
      %v1197 = vmax.f32 %v1133, 0.0
      %v1198 = vmax.f32 %v1134, 0.0
      %v1199 = vmax.f32 %v1135, 0.0
      %v1200 = vmax.f32 %v1136, 0.0
      %v1201 = vmax.f32 %v1137, 0.0
      %v1202 = vmax.f32 %v1138, 0.0
      %v1203 = vmax.f32 %v1139, 0.0
      %v1204 = vmax.f32 %v1140, 0.0
      %v1205 = vmax.f32 %v1141, 0.0
      %v1206 = vmax.f32 %v1142, 0.0
      %v1207 = vmax.f32 %v1143, 0.0
      %v1208 = vmax.f32 %v1144, 0.0
      %v1209 = vmax.f32 %v1145, 0.0
      %v1210 = vmax.f32 %v1146, 0.0
      %v1211 = vmax.f32 %v1147, 0.0
      %v1212 = vmax.f32 %v1148, 0.0
      %v1213 = vmax.f32 %v1149, 0.0
      %v1214 = vmax.f32 %v1150, 0.0
      %v1215 = vmax.f32 %v1151, 0.0
      %v1216 = vmax.f32 %v1152, 0.0
      %v1217 = vmax.f32 %v1153, 0.0
      %v1218 = vmax.f32 %v1154, 0.0
      %v1219 = vmax.f32 %v1155, 0.0
      %v1220 = vmax.f32 %v1156, 0.0
      %v1221 = vmax.f32 %v1157, 0.0
      %v1222 = vmax.f32 %v1158, 0.0
      %v1223 = vmax.f32 %v1159, 0.0
      %v1224 = vmax.f32 %v1160, 0.0
      %v1225 = vmax.f32 %v1161, 0.0
      %v1226 = vmax.f32 %v1162, 0.0
      %v1227 = vmax.f32 %v1163, 0.0
      %v1228 = vmax.f32 %v1164, 0.0
      %v1229 = vmax.f32 %v1165, 0.0
      %1230 = vst [vmem:[#allocation4] sm:$0xff] %v1166
      %1231 = vst [vmem:[#allocation4 + $0x8] sm:$0xff] %v1167
      %1232 = vst [vmem:[#allocation4 + $0x10] sm:$0xff] %v1168
      %1233 = vst [vmem:[#allocation4 + $0x18] sm:$0xff] %v1169
      %1234 = vst [vmem:[#allocation4 + $0x20] sm:$0xff] %v1170
      %1235 = vst [vmem:[#allocation4 + $0x28] sm:$0xff] %v1171
      %1236 = vst [vmem:[#allocation4 + $0x30] sm:$0xff] %v1172
      %1237 = vst [vmem:[#allocation4 + $0x38] sm:$0xff] %v1173
      %1238 = vst [vmem:[#allocation4 + $0x40] sm:$0xff] %v1174
      %1239 = vst [vmem:[#allocation4 + $0x48] sm:$0xff] %v1175
      %1240 = vst [vmem:[#allocation4 + $0x50] sm:$0xff] %v1176
      %1241 = vst [vmem:[#allocation4 + $0x58] sm:$0xff] %v1177
      %1242 = vst [vmem:[#allocation4 + $0x60] sm:$0xff] %v1178
      %1243 = vst [vmem:[#allocation4 + $0x68] sm:$0xff] %v1179
      %1244 = vst [vmem:[#allocation4 + $0x70] sm:$0xff] %v1180
      %1245 = vst [vmem:[#allocation4 + $0x78] sm:$0xff] %v1181
      %1246 = vst [vmem:[#allocation4 + $0x80] sm:$0xff] %v1182
      %1247 = vst [vmem:[#allocation4 + $0x88] sm:$0xff] %v1183
      %1248 = vst [vmem:[#allocation4 + $0x90] sm:$0xff] %v1184
      %1249 = vst [vmem:[#allocation4 + $0x98] sm:$0xff] %v1185
      %1250 = vst [vmem:[#allocation4 + $0xa0] sm:$0xff] %v1186
      %1251 = vst [vmem:[#allocation4 + $0xa8] sm:$0xff] %v1187
      %1252 = vst [vmem:[#allocation4 + $0xb0] sm:$0xff] %v1188
      %1253 = vst [vmem:[#allocation4 + $0xb8] sm:$0xff] %v1189
      %1254 = vst [vmem:[#allocation4 + $0xc0] sm:$0xff] %v1190
      %1255 = vst [vmem:[#allocation4 + $0xc8] sm:$0xff] %v1191
      %1256 = vst [vmem:[#allocation4 + $0xd0] sm:$0xff] %v1192
      %1257 = vst [vmem:[#allocation4 + $0xd8] sm:$0xff] %v1193
      %1258 = vst [vmem:[#allocation4 + $0xe0] sm:$0xff] %v1194
      %1259 = vst [vmem:[#allocation4 + $0xe8] sm:$0xff] %v1195
      %1260 = vst [vmem:[#allocation4 + $0xf0] sm:$0xff] %v1196
      %1261 = vst [vmem:[#allocation4 + $0xf8] sm:$0xff] %v1197
      %1262 = vst [vmem:[#allocation4 + $0x100] sm:$0xff] %v1198
      %1263 = vst [vmem:[#allocation4 + $0x108] sm:$0xff] %v1199
      %1264 = vst [vmem:[#allocation4 + $0x110] sm:$0xff] %v1200
      %1265 = vst [vmem:[#allocation4 + $0x118] sm:$0xff] %v1201
      %1266 = vst [vmem:[#allocation4 + $0x120] sm:$0xff] %v1202
      %1267 = vst [vmem:[#allocation4 + $0x128] sm:$0xff] %v1203
      %1268 = vst [vmem:[#allocation4 + $0x130] sm:$0xff] %v1204
      %1269 = vst [vmem:[#allocation4 + $0x138] sm:$0xff] %v1205
      %1270 = vst [vmem:[#allocation4 + $0x140] sm:$0xff] %v1206
      %1271 = vst [vmem:[#allocation4 + $0x148] sm:$0xff] %v1207
      %1272 = vst [vmem:[#allocation4 + $0x150] sm:$0xff] %v1208
      %1273 = vst [vmem:[#allocation4 + $0x158] sm:$0xff] %v1209
      %1274 = vst [vmem:[#allocation4 + $0x160] sm:$0xff] %v1210
      %1275 = vst [vmem:[#allocation4 + $0x168] sm:$0xff] %v1211
      %1276 = vst [vmem:[#allocation4 + $0x170] sm:$0xff] %v1212
      %1277 = vst [vmem:[#allocation4 + $0x178] sm:$0xff] %v1213
      %1278 = vst [vmem:[#allocation4 + $0x180] sm:$0xff] %v1214
      %1279 = vst [vmem:[#allocation4 + $0x188] sm:$0xff] %v1215
      %1280 = vst [vmem:[#allocation4 + $0x190] sm:$0xff] %v1216
      %1281 = vst [vmem:[#allocation4 + $0x198] sm:$0xff] %v1217
      %1282 = vst [vmem:[#allocation4 + $0x1a0] sm:$0xff] %v1218
      %1283 = vst [vmem:[#allocation4 + $0x1a8] sm:$0xff] %v1219
      %1284 = vst [vmem:[#allocation4 + $0x1b0] sm:$0xff] %v1220
      %1285 = vst [vmem:[#allocation4 + $0x1b8] sm:$0xff] %v1221
      %1286 = vst [vmem:[#allocation4 + $0x1c0] sm:$0xff] %v1222
      %1287 = vst [vmem:[#allocation4 + $0x1c8] sm:$0xff] %v1223
      %1288 = vst [vmem:[#allocation4 + $0x1d0] sm:$0xff] %v1224
      %1289 = vst [vmem:[#allocation4 + $0x1d8] sm:$0xff] %v1225
      %1290 = vst [vmem:[#allocation4 + $0x1e0] sm:$0xff] %v1226
      %1291 = vst [vmem:[#allocation4 + $0x1e8] sm:$0xff] %v1227
      %1292 = vst [vmem:[#allocation4 + $0x1f0] sm:$0xff] %v1228
      %1293 = vst [vmem:[#allocation4 + $0x1f8] sm:$0xff] %v1229
    $region25: #{tpu_custom_call.1} parent=1 // pred_fallthru
      _
    // Predicated region
    $region26: #{tpu_custom_call.1} parent=1 // pred_check
      _
    $region27: #{tpu_custom_call.1} parent=1 // pred_check_branch
      %1295 = sbr.rel (0) target = $region29
    $region28: #{tpu_custom_call.1} parent=1 // pred_region
      %s1297 = ssub.s32 8192, 8192
      %1298 = vsyncadd [#allocation5], %s1297
      %s1299 = sshll.u32 [#allocation4], 4
      %s1300 = int_to_ptr.vmem [resolvable:$true] %s1299
      %1305 = dma.vmem_to_hbm [thread:$0]  %s1300, 8192, %s4, [#allocation5], 128, 128, 8
    $region29: #{tpu_custom_call.1} parent=1 // pred_fallthru
      _
    // Predicated region
    $region30: #{tpu_custom_call.1} parent=1 // pred_check
      _
    $region31: #{tpu_custom_call.1} parent=1 // pred_check_branch
      %1307 = sbr.rel (0) target = $region33
    $region32: #{tpu_custom_call.1} parent=1 // pred_region
      %1308 = dma.done [#allocation5], 8192
    $region33: #{tpu_custom_call.1} parent=1 // pred_fallthru
      _
    %1309 = vsyncpa [#allocation5], 1

</llo_original>
